<compile_context>
chip_gen: v5e
topology: v5e:2x2
jax: 0.10.0
libtpu: 0.0.40
codegen_flags: <defaults>
</compile_context>

<pallas_src>
import jax
import jax.numpy as jnp
from jax.experimental import pallas as pl
from jax.experimental.pallas import tpu as pltpu

LANES = 128
TARGET_BLOCK_BYTES = 2 * 1024 * 1024   # ~2 MiB per block, regardless of dtype
MIN_GRID_STEPS = 4                     # keep >=4 balanced steps for dual-TC v7x


def _cdiv(a, b):
    return -(-a // b)


def _star_relu_kernel(sb_ref, x_ref, o_ref):
    # sb_ref: SMEM (2,) f32 -> [scale, bias]
    s = sb_ref[0]
    b = sb_ref[1]
    x = x_ref[...].astype(jnp.float32)   # compute in f32 vregs (v5e-safe)
    r = jnp.maximum(x, 0.0)
    o_ref[...] = (s * r * r + b).astype(o_ref.dtype)


def _star_relu_jnp(x, scale, bias):
    r = jnp.maximum(x.astype(jnp.float32), 0.0)
    return (scale * r * r + bias).astype(x.dtype)


def _choose_block_rows(rows, itemsize):
    """Dtype-aware, balanced block size (rows of 128 lanes)."""
    pack = max(8, 32 // itemsize)                     # f32->8, bf16->16, int8->32
    max_rows = (TARGET_BLOCK_BYTES // (LANES * itemsize)) // pack * pack
    max_rows = max(pack, max_rows)
    if rows <= pack:
        return rows                                   # single tiny full-extent block
    # Aim for at least MIN_GRID_STEPS evenly sized blocks (helps v7x TC split),
    # but never exceed the ~2 MiB per-block budget.
    steps = max(MIN_GRID_STEPS, _cdiv(rows, max_rows))
    br = _cdiv(rows, steps)
    br = _cdiv(br, pack) * pack                       # sublane-pack aligned
    return min(br, max_rows)


def star_relu(x, scale, bias):
    """Applies scale * relu(x)**2 + bias elementwise. x: any shape, float dtype."""
    orig_shape = x.shape
    dtype = x.dtype
    n = x.size

    # Normalize params: accept Python floats or PyTorch-style shape-(1,) arrays.
    s = jnp.asarray(scale, jnp.float32).reshape(())
    b = jnp.asarray(bias, jnp.float32).reshape(())
    scale_bias = jnp.stack([s, b])                    # (2,) f32 -> SMEM prefetch

    xf = x.reshape(-1)
    rem = n % LANES
    bulk = n - rem
    rows = bulk // LANES

    if rows == 0:
        # Tiny input (< 128 elements): not worth a kernel launch.
        return _star_relu_jnp(xf, s, b).reshape(orig_shape)

    x2d = xf[:bulk].reshape(rows, LANES)              # free bitcast when rem == 0

    block_rows = _choose_block_rows(rows, dtype.itemsize)
    grid = (_cdiv(rows, block_rows),)

    out2d = pl.pallas_call(
        _star_relu_kernel,
        out_shape=jax.ShapeDtypeStruct((rows, LANES), dtype),
        grid_spec=pltpu.PrefetchScalarGridSpec(
            num_scalar_prefetch=1,                    # scale_bias lands in SMEM
            grid=grid,
            in_specs=[
                pl.BlockSpec((block_rows, LANES), lambda i, sb: (i, 0)),
            ],
            out_specs=pl.BlockSpec((block_rows, LANES), lambda i, sb: (i, 0)),
        ),
        compiler_params=pltpu.CompilerParams(
            dimension_semantics=("parallel",),
        ),
    )(scale_bias, x2d)

    out_flat = out2d.reshape(-1)
    if rem:
        # <=127-element tail computed in plain JAX (no full-array pad/slice).
        tail = _star_relu_jnp(xf[bulk:], s, b)
        out_flat = jnp.concatenate([out_flat, tail])
    return out_flat.reshape(orig_shape)


def star_relu_ref(x, scale, bias):
    s = jnp.asarray(scale, jnp.float32).reshape(())
    b = jnp.asarray(bias, jnp.float32).reshape(())
    r = jnp.maximum(x.astype(jnp.float32), 0.0)
    return (s * r * r + b).astype(x.dtype)


if __name__ == "__main__":
    key = jax.random.PRNGKey(0)

    # Module defaults: scale = 1.0 * ones(1), bias = 0.0 * ones(1)
    scale_value = 1.0
    bias_value = 0.0

    # --- main check: NCHW f32, lane-divisible, multi-step balanced grid ----
    x = jax.random.normal(key, (2, 4, 16, 16), dtype=jnp.float32)  # n = 2048
    y = jax.block_until_ready(star_relu(x, scale_value, bias_value))
    y_ref = star_relu_ref(x, scale_value, bias_value)
    assert y.shape == x.shape and y.dtype == x.dtype
    assert jnp.allclose(y, y_ref, atol=1e-6, rtol=1e-6)

    # --- PyTorch-style shape-(1,) learnable params + bf16 native dtype -----
    k1, k2, k3 = jax.random.split(key, 3)
    xb = jax.random.normal(k1, (2, 4, 16, 16), dtype=jnp.bfloat16)
    sb_scale = jnp.full((1,), 0.8944, dtype=jnp.float32)
    sb_bias = jnp.full((1,), -0.4472, dtype=jnp.float32)
    yb = jax.block_until_ready(star_relu(xb, sb_scale, sb_bias))
    yb_ref = star_relu_ref(xb, sb_scale, sb_bias)
    assert yb.dtype == jnp.bfloat16
    assert jnp.allclose(yb.astype(jnp.float32), yb_ref.astype(jnp.float32),
                        atol=2e-2, rtol=2e-2)

    # --- multi-block grid, evenly split (rows = 4224 -> 4 x 1056) ----------
    xl = jax.random.normal(k2, (8, 64, 32, 33), dtype=jnp.float32)  # n = 540672
    yl = jax.block_until_ready(star_relu(xl, 0.5, 0.25))
    yl_ref = star_relu_ref(xl, 0.5, 0.25)
    assert jnp.allclose(yl, yl_ref, atol=1e-6, rtol=1e-6)

    # --- non-lane-divisible: bulk kernel + plain-JAX tail, masked last block
    xt = jax.random.normal(k3, (3, 1000), dtype=jnp.float32)  # n = 3000, rem = 56
    yt = jax.block_until_ready(star_relu(xt, 1.3, -0.1))
    yt_ref = star_relu_ref(xt, 1.3, -0.1)
    assert jnp.allclose(yt, yt_ref, atol=1e-6, rtol=1e-6)

    # --- tiny (< 128 elements): pure-JAX fallback ---------------------------
    xo = jax.random.normal(key, (3, 5, 7), dtype=jnp.float32)  # n = 105
    yo = jax.block_until_ready(star_relu(xo, 1.3, -0.1))
    yo_ref = star_relu_ref(xo, 1.3, -0.1)
    assert jnp.allclose(yo, yo_ref, atol=1e-6, rtol=1e-6)

    print("KERNEL_OK")
</pallas_src>

<mosaic_0001>
module attributes {stable_mosaic.version = 11 : i64} {
  func.func @_star_relu_kernel(%arg0: i32, %arg1: memref<2xf32, #tpu.memory_space<smem>>, %arg2: memref<8x128xf32, #tpu.memory_space<vmem>>, %arg3: memref<8x128xf32, #tpu.memory_space<vmem>>) attributes {dimension_semantics = [#tpu.dimension_semantics<parallel>], iteration_bounds = array<i64: 2>, scalar_prefetch = 1 : i64, scratch_operands = 0 : i64, tpu.core_type = #tpu.core_type<tc>, window_params = [{transform_indices = @transform_0, window_bounds = array<i64: 8, 128>}, {transform_indices = @transform_1, window_bounds = array<i64: 8, 128>}]} {
    %c0 = arith.constant 0 : index
    %0 = memref.load %arg1[%c0] : memref<2xf32, #tpu.memory_space<smem>>
    %c1 = arith.constant 1 : index
    %1 = memref.load %arg1[%c1] : memref<2xf32, #tpu.memory_space<smem>>
    %c0_0 = arith.constant 0 : index
    %c0_1 = arith.constant 0 : index
    %2 = vector.load %arg2[%c0_0, %c0_1] : memref<8x128xf32, #tpu.memory_space<vmem>>, vector<8x128xf32>
    %cst = arith.constant 0.000000e+00 : f32
    %3 = vector.broadcast %cst : f32 to vector<8x128xf32>
    %4 = arith.maximumf %2, %3 : vector<8x128xf32>
    %5 = vector.broadcast %0 : f32 to vector<8x128xf32>
    %6 = arith.mulf %5, %4 : vector<8x128xf32>
    %7 = arith.mulf %6, %4 : vector<8x128xf32>
    %8 = vector.broadcast %1 : f32 to vector<8x128xf32>
    %9 = arith.addf %7, %8 : vector<8x128xf32>
    %c0_2 = arith.constant 0 : index
    %c0_3 = arith.constant 0 : index
    %10 = vector.load %arg3[%c0_2, %c0_3] : memref<8x128xf32, #tpu.memory_space<vmem>>, vector<8x128xf32>
    tpu.vector_store %arg3[%c0_2, %c0_3], %9 {strides = array<i32>} : memref<8x128xf32, #tpu.memory_space<vmem>>, vector<8x128xf32>,
    return
  }
  func.func @transform_0(%arg0: i32, %arg1: memref<2xf32, #tpu.memory_space<smem>>) -> (i32, i32) {
    %c0_i32 = arith.constant 0 : i32
    %c0_i32_0 = arith.constant 0 : i32
    return %arg0, %c0_i32 : i32, i32
  }
  func.func @transform_1(%arg0: i32, %arg1: memref<2xf32, #tpu.memory_space<smem>>) -> (i32, i32) {
    %c0_i32 = arith.constant 0 : i32
    %c0_i32_0 = arith.constant 0 : i32
    return %arg0, %c0_i32 : i32, i32
  }
}

</mosaic_0001>

<llo_original>
// kernel: tpu_custom_call.1
$region0: #{tpu_custom_call.1}
  #allocation0 [shape = 'u32[]', space=smem, size = 0x4, offset = 0x4, fixed_abs, tag = 'smem constant byte address 0x4 - core index']
  #allocation1 [shape = 'u32[72,128]{1,0:T(1,128)}', space=vmem, size = 0x9000, scoped, tag = 'internal scratch']
  #allocation2 [shape = 's32[1]{0}', space=sflag, size = 0x4, scoped, tag = 'scoped memory for tpu_custom_call.1']
  #allocation3 [shape = 'u8[512]{0}', space=smem, size = 0x200, scoped, tag = 'prefetched SMEM operand 0']
  %s0 = inlined_call_operand.hbm [shape: f32[2], index: 0, kind: input, shape index: {}]
  %s1 = inlined_call_operand.hbm [shape: f32[16,128], index: 1, kind: input, shape index: {}]
  %s2 = inlined_call_operand.hbm [shape: f32[16,128], index: 2, kind: output, shape index: {}]
  %s3 = sld [smem:[#allocation0]]
  $region41: #{tpu_custom_call.1} parent=0
    _
  %s5 = ssub.s32 1, %s3
  %s6 = scalar_select 0, %s5, %s3
  %s8 = sshll.u32 %s0, 4
  %s9 = int_to_ptr.hbm [resolvable:$true] %s8
  %11 = dma.hbm_to_smem %s9, 16, [#allocation3], [#allocation2]
  %13 = dma.done [#allocation2], 16
  %14 = sfence
  $region1: #{tpu_custom_call.1} parent=0
    #allocation4 [shape = 'u8[8192]{0}', space=vmem, size = 0x2000, scoped, tag = 'input window, operand 1']
    #allocation5 [shape = 's32[2]{0}', space=sflag, size = 0x8, scoped, tag = 'scoped memory for tpu_custom_call.1']
    #allocation6 [shape = 's32[2]{0}', space=sflag, size = 0x8, scoped, tag = 'scoped memory for tpu_custom_call.1']
    #allocation7 [shape = 'u8[8192]{0}', space=vmem, size = 0x2000, scoped, tag = 'output window, operand 0']
    %15 = vsyncpa [#allocation5], 0
    %s16 = scalar_lea.sflag [#allocation5], 1
    %17 = vsyncpa %s16, 0
    %18 = vsyncpa [#allocation6], 0
    %s19 = scalar_lea.sflag [#allocation6], 1
    %20 = vsyncpa %s19, 0
    loop: start=0, step=1, limit=4
    $region2: #{tpu_custom_call.1} parent=1 // loop_pre_header
      _
    $region3: #{tpu_custom_call.1} parent=1 // loop_header
      %s22 = sphi 0, %s26
      %p23 = scmp.ge.s32.totalorder %s22, 4
      %s32 = sphi 0, %s34
      %s35 = sphi 0, %s32
      %s36 = sphi 0, %s35
      %s52 = sphi 0, %s36
      %s58 = sphi 0, %s60
      %s61 = sphi 0, %s58
      %s62 = sphi 0, %s61
      %s78 = sphi 0, %s62
    $region4: #{tpu_custom_call.1} parent=1 // loop_header_branch
      %25 = sbr.rel (%p23) target = $region8
    $region5: #{tpu_custom_call.1} parent=1 // loop_body
      %s27 = ssub.s32 %s22, 1
      %s28 = ssub.s32 %s22, 2
      %s29 = sadd.s32 %s22, 1
      %s30 = ssub.s32 %s22, %s29
      %p31 = scmp.eq.s32.totalorder %s30, 0
      %s33 = sadd.s32 %s32, 1
      %s34 = scalar_select %p31, %s32, %s33
      %p37 = pneg %p31
      %p38 = scmp.eq.s32.totalorder %s22, 1
      %p39 = por %p37, %p38
      %p40 = scmp.ne.s32.totalorder %s32, %s35
      %p41 = scmp.eq.s32.totalorder %s22, 0
      %p42 = por %p40, %p41
      %p43 = scmp.ne.s32.totalorder %s32, %s35
      %p44 = scmp.eq.s32.totalorder %s27, 1
      %p45 = por %p43, %p44
      %p46 = scmp.ne.s32.totalorder %s35, %s36
      %p47 = scmp.eq.s32.totalorder %s27, 0
      %p48 = por %p46, %p47
      %p49 = scmp.ne.s32.totalorder %s35, %s36
      %p50 = scmp.eq.s32.totalorder %s28, 1
      %p51 = por %p49, %p50
      %p53 = scmp.ne.s32.totalorder %s36, %s52
      %p54 = scmp.eq.s32.totalorder %s28, 0
      %p55 = por %p53, %p54
      %s56 = ssub.s32 %s22, %s29
      %p57 = scmp.eq.s32.totalorder %s56, 0
      %s59 = sadd.s32 %s58, 1
      %s60 = scalar_select %p57, %s58, %s59
      %p63 = pneg %p57
      %p64 = scmp.eq.s32.totalorder %s22, 1
      %p65 = por %p63, %p64
      %p66 = scmp.ne.s32.totalorder %s58, %s61
      %p67 = scmp.eq.s32.totalorder %s22, 0
      %p68 = por %p66, %p67
      %p69 = scmp.ne.s32.totalorder %s58, %s61
      %p70 = scmp.eq.s32.totalorder %s27, 1
      %p71 = por %p69, %p70
      %p72 = scmp.ne.s32.totalorder %s61, %s62
      %p73 = scmp.eq.s32.totalorder %s27, 0
      %p74 = por %p72, %p73
      %p75 = scmp.ne.s32.totalorder %s61, %s62
      %p76 = scmp.eq.s32.totalorder %s28, 1
      %p77 = por %p75, %p76
      %p79 = scmp.ne.s32.totalorder %s62, %s78
      %p80 = scmp.eq.s32.totalorder %s28, 0
      %p81 = por %p79, %p80
      %p82 = scmp.le.s32.totalorder 1, %s22
      %p83 = scmp.lt.s32.totalorder %s22, 3
      %p84 = pnand %p82, %p83
      %p85 = pneg %p84
      // Predicated region
      $region9: #{tpu_custom_call.1} parent=5 // pred_check
        _
      $region10: #{tpu_custom_call.1} parent=5 // pred_check_branch
        %87 = sbr.rel (%p84) target = $region12
      $region11: #{tpu_custom_call.1} parent=5 // pred_region
        %s88 = ssub.s32 %s22, 1
      $region12: #{tpu_custom_call.1} parent=5 // pred_fallthru
        _
      %p89 = scmp.lt.s32.totalorder %s22, 2
      // Predicated region
      $region13: #{tpu_custom_call.1} parent=5 // pred_check
        %p90 = pneg %p89
      $region14: #{tpu_custom_call.1} parent=5 // pred_check_branch
        %92 = sbr.rel (%p90) target = $region16
      $region15: #{tpu_custom_call.1} parent=5 // pred_region
        // Predicated region
        $region17: #{tpu_custom_call.1} parent=15 // pred_check
          %p93 = pneg %p42
        $region18: #{tpu_custom_call.1} parent=15 // pred_check_branch
          %95 = sbr.rel (%p93) target = $region20
        $region19: #{tpu_custom_call.1} parent=15 // pred_region
          %s96 = sand.u32 %s32, 1
          %s97 = scalar_lea.sflag [#allocation5], %s96
          %s98 = sand.u32 %s32, 1
          %s99 = smul.addr %s98, 8
          %s100 = scalar_lea.vmem [#allocation4], %s99
          %102 = vsyncadd %s97, 0
          %s103 = smul.addr %s22, 8
          %s104 = scalar_lea.hbm %s1, %s103
          %s106 = sshll.u32 %s104, 4
          %s107 = int_to_ptr.hbm [resolvable:$true] %s106
          %s108 = sshll.u32 %s100, 4
          %s109 = int_to_ptr.vmem [resolvable:$true] %s108
          %111 = dma.hbm_to_vmem [thread:$0]  %s107, 128, %s109, %s97
        $region20: #{tpu_custom_call.1} parent=15 // pred_fallthru
          _
      $region16: #{tpu_custom_call.1} parent=5 // pred_fallthru
        _
      %p112 = scmp.le.s32.totalorder 1, %s22
      %p113 = scmp.lt.s32.totalorder %s22, 3
      %p114 = pnand %p112, %p113
      %p115 = pneg %p114
      // Predicated region
      $region21: #{tpu_custom_call.1} parent=5 // pred_check
        _
      $region22: #{tpu_custom_call.1} parent=5 // pred_check_branch
        %117 = sbr.rel (%p114) target = $region24
      $region23: #{tpu_custom_call.1} parent=5 // pred_region
        %s118 = ssub.s32 %s22, 1
        %s119 = sand.u32 %s35, 1
        %s120 = scalar_lea.sflag [#allocation5], %s119
        %s121 = sand.u32 %s35, 1
        %s122 = smul.addr %s121, 8
        %s123 = scalar_lea.vmem [#allocation4], %s122
        // Predicated region
        $region25: #{tpu_custom_call.1} parent=23 // pred_check
          %p124 = pneg %p48
        $region26: #{tpu_custom_call.1} parent=23 // pred_check_branch
          %126 = sbr.rel (%p124) target = $region28
        $region27: #{tpu_custom_call.1} parent=23 // pred_region
          %128 = dma.done %s120, 128
        $region28: #{tpu_custom_call.1} parent=23 // pred_fallthru
          _
        %s129 = sand.u32 %s35, 1
        %s130 = scalar_lea.sflag [#allocation5], %s129
        %s131 = sand.u32 %s35, 1
        %s132 = smul.addr %s131, 8
        %s133 = scalar_lea.vmem [#allocation4], %s132
        %p134 = pneg %p48
        %p135 = pneg %p45
        %p136 = pneg %p74
        %p137 = pneg %p71
        %s138 = sand.u32 %s61, 1
        %s139 = scalar_lea.sflag [#allocation6], %s138
        %s140 = sand.u32 %s61, 1
        %s141 = smul.addr %s140, 8
        %s142 = scalar_lea.vmem [#allocation7], %s141
        %s143 = sld [smem:[#allocation3]]
        %s144 = sld [smem:[#allocation3 + $0x1]]
        %v145 = vld [vmem:[%s123] sm:$0xff]
        %v146 = vmax.f32 %v145, 0.0
        %v147 = vstv %s143
        %v148 = vmul.f32 %v147, %v146
        %v149 = vmul.f32 %v148, %v146
        %v150 = vstv %s144
        %v151 = vadd.f32 %v149, %v150
        %152 = vst [vmem:[%s142] sm:$0xff] %v151
        %s153 = sand.u32 %s61, 1
        %s154 = scalar_lea.sflag [#allocation6], %s153
        %s155 = sand.u32 %s61, 1
        %s156 = smul.addr %s155, 8
        %s157 = scalar_lea.vmem [#allocation7], %s156
        // Predicated region
        $region29: #{tpu_custom_call.1} parent=23 // pred_check
          %p158 = pneg %p71
        $region30: #{tpu_custom_call.1} parent=23 // pred_check_branch
          %160 = sbr.rel (%p158) target = $region32
        $region31: #{tpu_custom_call.1} parent=23 // pred_region
          %162 = vsyncadd %s154, 0
          %s163 = smul.addr %s27, 8
          %s164 = scalar_lea.hbm %s2, %s163
          %s166 = sshll.u32 %s157, 4
          %s167 = int_to_ptr.vmem [resolvable:$true] %s166
          %s168 = sshll.u32 %s164, 4
          %s169 = int_to_ptr.hbm [resolvable:$true] %s168
          %171 = dma.vmem_to_hbm [thread:$0]  %s167, 128, %s169, %s154
        $region32: #{tpu_custom_call.1} parent=23 // pred_fallthru
          _
      $region24: #{tpu_custom_call.1} parent=5 // pred_fallthru
        _
      %p172 = scmp.le.s32.totalorder 2, %s22
      // Predicated region
      $region33: #{tpu_custom_call.1} parent=5 // pred_check
        %p173 = pneg %p172
      $region34: #{tpu_custom_call.1} parent=5 // pred_check_branch
        %175 = sbr.rel (%p173) target = $region36
      $region35: #{tpu_custom_call.1} parent=5 // pred_region
        %s176 = ssub.s32 %s22, 2
        // Predicated region
        $region37: #{tpu_custom_call.1} parent=35 // pred_check
          %p177 = pneg %p77
        $region38: #{tpu_custom_call.1} parent=35 // pred_check_branch
          %179 = sbr.rel (%p177) target = $region40
        $region39: #{tpu_custom_call.1} parent=35 // pred_region
          %s180 = sand.u32 %s62, 1
          %s181 = scalar_lea.sflag [#allocation6], %s180
          %s182 = sand.u32 %s62, 1
          %s183 = smul.addr %s182, 8
          %s184 = scalar_lea.vmem [#allocation7], %s183
          %186 = dma.done %s181, 128
        $region40: #{tpu_custom_call.1} parent=35 // pred_fallthru
          _
      $region36: #{tpu_custom_call.1} parent=5 // pred_fallthru
        _
    $region6: #{tpu_custom_call.1} parent=1 // loop_footer
      %s26 = sadd.s32 1, %s22
    $region7: #{tpu_custom_call.1} parent=1 // loop_footer_branch
      %21 = sbr.rel target = $region3
    $region8: #{tpu_custom_call.1} parent=1 // loop_exit
      _
    %187 = vsyncpa [#allocation5], 1
    %s188 = scalar_lea.sflag [#allocation5], 1
    %189 = vsyncpa %s188, 1
    %190 = vsyncpa [#allocation6], 1
    %s191 = scalar_lea.sflag [#allocation6], 1
    %192 = vsyncpa %s191, 1

</llo_original>
